<compile_context>
chip_gen: v7x
topology: tpu7x:2x2x1
jax: 0.10.0
libtpu: 0.0.40
codegen_flags: <defaults>
</compile_context>

<pallas_src>
import math
import functools

import jax
import jax.numpy as jnp
from jax.experimental import pallas as pl
from jax.experimental.pallas import tpu as pltpu

LN_EPS = 1e-5  # torch.nn.LayerNorm default


# --------------------------------------------------------------------------
# generation-aware VMEM budget / tile targets
# --------------------------------------------------------------------------
def _vmem_budget():
    try:
        phys = int(pltpu.get_tpu_info().vmem_capacity_bytes)
    except Exception:
        phys = 64 << 20                      # conservative (v7x per-TC VMEM)
    # leave 16 MiB headroom for compiler scratch; never request below 32 MiB
    return max(phys - (16 << 20), 32 << 20)


_VMEM_BUDGET = _vmem_budget()
# v5e / v6e (128 MiB VMEM) -> bigger row tiles = fewer weight re-streams;
# v7x (64 MiB VMEM) -> stay at 256.
_TM_TARGET = 512 if _VMEM_BUDGET >= (96 << 20) else 256


def _pick_tile(dim, target, align):
    """Largest `align`-multiple tile <= target dividing dim, else full dim."""
    if dim <= target:
        return dim
    t = (target // align) * align
    while t >= align:
        if dim % t == 0:
            return t
        t -= align
    return dim                                # full dim is always a legal block


def _vmem_limit(blocks, extra_bytes=0):
    """Explicit scoped-VMEM request from tile sizes (double-buffered) + slack."""
    total = extra_bytes
    for shape, dtype in blocks:
        total += math.prod(shape) * jnp.dtype(dtype).itemsize
    return int(min(max(2 * total + (4 << 20), 32 << 20), _VMEM_BUDGET))


# --------------------------------------------------------------------------
# Kernel: fused LayerNorm -> Linear (-> GELU), tiled over (M, N).
# LN(x) is computed once per row tile (j == 0) into a bf16 VMEM scratch and
# reused for every output tile j.
# --------------------------------------------------------------------------
def ln_linear_kernel(*refs, activation, has_bias):
    if has_bias:
        x_ref, g_ref, b_ref, w_ref, bias_ref, o_ref, h_ref = refs
    else:
        x_ref, g_ref, b_ref, w_ref, o_ref, h_ref = refs
        bias_ref = None

    @pl.when(pl.program_id(1) == 0)
    def _():
        x = x_ref[...].astype(jnp.float32)                 # (tm, C)
        mu = jnp.mean(x, axis=-1, keepdims=True)
        xc = x - mu
        var = jnp.mean(xc * xc, axis=-1, keepdims=True)    # two-pass variance
        h = xc * jax.lax.rsqrt(var + LN_EPS)
        h = h * g_ref[0].astype(jnp.float32) + b_ref[0].astype(jnp.float32)
        h_ref[...] = h.astype(jnp.bfloat16)

    acc = jnp.dot(h_ref[...], w_ref[...],                  # bf16 MXU, f32 acc
                  preferred_element_type=jnp.float32)
    if has_bias:
        acc = acc + bias_ref[0].astype(jnp.float32)
    if activation == "gelu":
        # TODO(synk): torch.nn.GELU() default is exact erf; tanh approx used
        # here (~1e-3 drift) to stay on well-supported EUP lowering.
        acc = jax.nn.gelu(acc, approximate=True)
    o_ref[...] = acc.astype(o_ref.dtype)


def ln_linear(x, g, b, w, bias=None, *, activation=None, out_dtype=jnp.float32,
              tm_target=None, tn_target=512):
    M, C = x.shape
    N = w.shape[1]
    tm = _pick_tile(M, tm_target or _TM_TARGET, 16)
    tn = _pick_tile(N, tn_target, 128)
    has_bias = bias is not None
    blocks = [((tm, C), x.dtype), ((C, tn), w.dtype), ((tm, tn), out_dtype),
              ((1, C), g.dtype), ((1, C), b.dtype), ((tm, C), jnp.bfloat16)]
    in_specs = [pl.BlockSpec((tm, C), lambda i, j: (i, 0)),
                pl.BlockSpec((1, C), lambda i, j: (0, 0)),
                pl.BlockSpec((1, C), lambda i, j: (0, 0)),
                pl.BlockSpec((C, tn), lambda i, j: (0, j))]
    operands = [x, g, b, w]
    if has_bias:
        blocks.append(((1, tn), bias.dtype))
        in_specs.append(pl.BlockSpec((1, tn), lambda i, j: (0, j)))
        operands.append(bias)
    kernel = functools.partial(ln_linear_kernel, activation=activation,
                               has_bias=has_bias)
    return pl.pallas_call(
        kernel,
        out_shape=jax.ShapeDtypeStruct((M, N), out_dtype),
        grid=(M // tm, N // tn),                       # j (N tiles) innermost
        in_specs=in_specs,
        out_specs=pl.BlockSpec((tm, tn), lambda i, j: (i, j)),
        scratch_shapes=[pltpu.VMEM((tm, C), jnp.bfloat16)],
        compiler_params=pltpu.CompilerParams(
            dimension_semantics=("parallel", "arbitrary"),
            vmem_limit_bytes=_vmem_limit(blocks)),
    )(*operands)


# --------------------------------------------------------------------------
# Kernel: Linear + bias + residual add, tiled over (M, N)
#   out[i, j] = h[i, :] @ W[:, j] + b[j] + res[i, j]
# --------------------------------------------------------------------------
def linear_res_kernel(h_ref, w_ref, bias_ref, res_ref, o_ref):
    h = h_ref[...]
    if h.dtype != jnp.bfloat16:
        h = h.astype(jnp.bfloat16)
    acc = jnp.dot(h, w_ref[...], preferred_element_type=jnp.float32)
    acc = acc + bias_ref[0].astype(jnp.float32) + res_ref[...].astype(jnp.float32)
    o_ref[...] = acc.astype(o_ref.dtype)


def linear_residual(h, w, bias, res, *, out_dtype=jnp.float32,
                    tm_target=None, tn_target=512):
    M, K = h.shape
    N = w.shape[1]
    tm = _pick_tile(M, tm_target or _TM_TARGET, 16)
    tn = _pick_tile(N, tn_target, 128)
    vmem = _vmem_limit([((tm, K), h.dtype), ((K, tn), w.dtype),
                        ((1, tn), bias.dtype), ((tm, tn), res.dtype),
                        ((tm, tn), out_dtype)])
    return pl.pallas_call(
        linear_res_kernel,
        out_shape=jax.ShapeDtypeStruct((M, N), out_dtype),
        grid=(M // tm, N // tn),
        in_specs=[pl.BlockSpec((tm, K), lambda i, j: (i, 0)),
                  pl.BlockSpec((K, tn), lambda i, j: (0, j)),
                  pl.BlockSpec((1, tn), lambda i, j: (0, j)),
                  pl.BlockSpec((tm, tn), lambda i, j: (i, j))],
        out_specs=pl.BlockSpec((tm, tn), lambda i, j: (i, j)),
        compiler_params=pltpu.CompilerParams(
            dimension_semantics=("parallel", "parallel"),
            vmem_limit_bytes=vmem),
    )(h, w, bias, res)


# --------------------------------------------------------------------------
# Kernel: causal flash attention, grid over (batch, head, q-tile).
# q, k, v: (B, H, T, D) bf16.  In-kernel fori_loop over KV tiles with running
# m/l/acc accumulators; dynamic trip count skips KV tiles that lie entirely
# above the causal diagonal for this q tile.  MXU matmuls in bf16, softmax f32.
# --------------------------------------------------------------------------
def attention_kernel(q_ref, k_ref, v_ref, o_ref, *, scale, tk):
    q = q_ref[0, 0]                                   # (tq, D) bf16
    tq, D = q.shape
    q_start = pl.program_id(2) * tq
    num_kv = (q_start + tq + tk - 1) // tk            # causal KV-tile skipping

    def body(kv, carry):
        m_prev, l_prev, acc_prev = carry
        ks = pl.multiple_of(kv * tk, tk)
        k = k_ref[0, 0, pl.ds(ks, tk), :]             # (tk, D) bf16
        v = v_ref[0, 0, pl.ds(ks, tk), :]             # (tk, D) bf16
        s = jax.lax.dot_general(q, k, (((1,), (1,)), ((), ())),
                                preferred_element_type=jnp.float32) * scale
        row = q_start + jax.lax.broadcasted_iota(jnp.int32, (tq, tk), 0)
        col = ks + jax.lax.broadcasted_iota(jnp.int32, (tq, tk), 1)
        # diagonal of each q row is always inside the loop range -> no NaN
        s = jnp.where(col <= row, s, -jnp.inf)
        m_new = jnp.maximum(m_prev, jnp.max(s, axis=-1, keepdims=True))
        alpha = jnp.exp(m_prev - m_new)
        p = jnp.exp(s - m_new)
        l_new = alpha * l_prev + jnp.sum(p, axis=-1, keepdims=True)
        acc_new = alpha * acc_prev + jnp.dot(p.astype(jnp.bfloat16), v,
                                             preferred_element_type=jnp.float32)
        return m_new, l_new, acc_new

    m0 = jnp.full((tq, 1), -jnp.inf, dtype=jnp.float32)
    l0 = jnp.zeros((tq, 1), dtype=jnp.float32)
    a0 = jnp.zeros((tq, D), dtype=jnp.float32)
    _, l, acc = jax.lax.fori_loop(0, num_kv, body, (m0, l0, a0))
    o_ref[0, 0] = (acc * pl.reciprocal(l, approx=True)).astype(o_ref.dtype)


def causal_attention(q, k, v, *, tq_target=256, tk_target=128):
    B, H, T, D = q.shape
    tq = _pick_tile(T, tq_target, 16)
    tk = _pick_tile(T, tk_target, 16)
    scale = 1.0 / math.sqrt(D)
    vmem = _vmem_limit([((1, 1, tq, D), q.dtype), ((1, 1, T, D), k.dtype),
                        ((1, 1, T, D), v.dtype), ((1, 1, tq, D), q.dtype)],
                       extra_bytes=4 * tq * tk * 4)
    kernel = functools.partial(attention_kernel, scale=scale, tk=tk)
    return pl.pallas_call(
        kernel,
        out_shape=jax.ShapeDtypeStruct((B, H, T, D), q.dtype),
        grid=(B, H, T // tq),
        in_specs=[pl.BlockSpec((1, 1, tq, D), lambda b, h, t: (b, h, t, 0)),
                  pl.BlockSpec((1, 1, T, D), lambda b, h, t: (b, h, 0, 0)),
                  pl.BlockSpec((1, 1, T, D), lambda b, h, t: (b, h, 0, 0))],
        out_specs=pl.BlockSpec((1, 1, tq, D), lambda b, h, t: (b, h, t, 0)),
        compiler_params=pltpu.CompilerParams(
            dimension_semantics=("parallel", "parallel", "parallel"),
            vmem_limit_bytes=vmem),
    )(q, k, v)


# --------------------------------------------------------------------------
# Transformer block (eval mode: dropouts are identity)
# --------------------------------------------------------------------------
def transformer_block(x, p, n_head):
    B, T, C = x.shape
    D = C // n_head
    M = B * T
    x2 = x.reshape(M, C)                                    # f32 residual stream

    # ---- attention branch: x = x + proj(attn(ln_1(x))) ----
    qkv = ln_linear(x2, p['ln1_g'], p['ln1_b'], p['attn_w'], p['attn_b'],
                    activation=None, out_dtype=jnp.bfloat16)          # (M, 3C)
    # TODO(synk): express the head layout through attention BlockSpecs instead
    # of these bf16 XLA transposes (needs D >= 128 or head-grouped lane blocks).
    qkv = qkv.reshape(B, T, 3, n_head, D).transpose(2, 0, 3, 1, 4)    # (3,B,H,T,D)
    y = causal_attention(qkv[0], qkv[1], qkv[2])                      # (B,H,T,D) bf16
    y = y.transpose(0, 2, 1, 3).reshape(M, C)                         # bf16
    x2 = linear_residual(y, p['proj_w'], p['proj_b'], x2)             # + residual

    # ---- MLP branch: x = x + fc2(gelu(fc1(ln_2(x)))) ----
    h = ln_linear(x2, p['ln2_g'], p['ln2_b'], p['fc_w'], p['fc_b'],
                  activation="gelu", out_dtype=jnp.bfloat16)          # (M, 4C)
    x2 = linear_residual(h, p['fc2_w'], p['fc2_b'], x2)               # + residual
    return x2.reshape(B, T, C)


# --------------------------------------------------------------------------
# Parameter init (deterministic, GPT-style normal(0, 0.02)); weights in bf16.
# The tied lm_head weight is also stored pre-transposed (C, V) so the final
# matmul streams a lane-major weight with no per-tile / per-forward transpose.
# --------------------------------------------------------------------------
def init_params(key, vocab_size, n_embd, n_head, n_layer, block_size):
    del n_head
    std = 0.02
    C = n_embd
    keys = jax.random.split(key, 2 + n_layer)
    wte = (jax.random.normal(keys[0], (vocab_size, C), jnp.float32) * std
           ).astype(jnp.bfloat16)                        # tied with lm_head
    wpe = jax.random.normal(keys[1], (block_size, C), jnp.float32) * std
    blocks = []
    for i in range(n_layer):
        ks = jax.random.split(keys[2 + i], 4)
        blocks.append(dict(
            ln1_g=jnp.ones((1, C), jnp.float32), ln1_b=jnp.zeros((1, C), jnp.float32),
            attn_w=(jax.random.normal(ks[0], (C, 3 * C), jnp.float32) * std).astype(jnp.bfloat16),
            attn_b=jnp.zeros((1, 3 * C), jnp.float32),
            proj_w=(jax.random.normal(ks[1], (C, C), jnp.float32) * std).astype(jnp.bfloat16),
            proj_b=jnp.zeros((1, C), jnp.float32),
            ln2_g=jnp.ones((1, C), jnp.float32), ln2_b=jnp.zeros((1, C), jnp.float32),
            fc_w=(jax.random.normal(ks[2], (C, 4 * C), jnp.float32) * std).astype(jnp.bfloat16),
            fc_b=jnp.zeros((1, 4 * C), jnp.float32),
            fc2_w=(jax.random.normal(ks[3], (4 * C, C), jnp.float32) * std).astype(jnp.bfloat16),
            fc2_b=jnp.zeros((1, C), jnp.float32),
        ))
    return dict(wte=wte, wte_t=wte.T, wpe=wpe, blocks=blocks,
                lnf_g=jnp.ones((1, C), jnp.float32),
                lnf_b=jnp.zeros((1, C), jnp.float32))


# --------------------------------------------------------------------------
# Full GPT forward (eval mode: all dropouts are identity).
# --------------------------------------------------------------------------
def gpt_forward(params, idx, n_head, targets=None):
    B, T = idx.shape
    C = params['wpe'].shape[1]
    tok_emb = jnp.take(params['wte'], idx, axis=0).astype(jnp.float32)  # (B,T,C)
    pos_emb = params['wpe'][:T].astype(jnp.float32)                     # (T,C)
    x = tok_emb + pos_emb[None]                                         # drop == id
    for bp in params['blocks']:
        x = transformer_block(x, bp, n_head)
    # final LN + tied lm_head (no bias), LN hoisted inside the kernel
    logits = ln_linear(x.reshape(B * T, C), params['lnf_g'], params['lnf_b'],
                       params['wte_t'], bias=None, activation=None,
                       out_dtype=jnp.float32).reshape(B, T, -1)
    loss = None
    if targets is not None:
        logp = jax.nn.log_softmax(logits.reshape(-1, logits.shape[-1]), axis=-1)
        loss = -jnp.mean(jnp.take_along_axis(logp, targets.reshape(-1, 1), axis=-1))
    return logits, loss


if __name__ == "__main__":
    # small shapes consistent with the module (n_embd divisible by n_head)
    vocab_size = 256
    n_embd = 128
    n_head = 4
    n_layer = 2
    block_size = 16
    B, T = 2, 8

    key = jax.random.PRNGKey(0)
    pkey, ikey = jax.random.split(key)
    params = init_params(pkey, vocab_size, n_embd, n_head, n_layer, block_size)
    idx = jax.random.randint(ikey, (B, T), 0, vocab_size, dtype=jnp.int32)

    logits, loss = gpt_forward(params, idx, n_head, targets=None)
    jax.block_until_ready(logits)
    assert logits.shape == (B, T, vocab_size)
    assert loss is None
    print("KERNEL_OK")
</pallas_src>

<mosaic_0001>
module attributes {stable_mosaic.version = 11 : i64} {
  func.func @ln_linear_kernel(%arg0: i32, %arg1: i32, %arg2: memref<16x128xf32, #tpu.memory_space<vmem>>, %arg3: memref<1x128xf32, #tpu.memory_space<vmem>>, %arg4: memref<1x128xf32, #tpu.memory_space<vmem>>, %arg5: memref<128x384xbf16, #tpu.memory_space<vmem>>, %arg6: memref<1x384xf32, #tpu.memory_space<vmem>>, %arg7: memref<16x384xbf16, #tpu.memory_space<vmem>>, %arg8: memref<16x128xbf16, #tpu.memory_space<vmem>>) attributes {dimension_semantics = [#tpu.dimension_semantics<parallel>, #tpu.dimension_semantics<arbitrary>], iteration_bounds = array<i64: 1, 1>, scalar_prefetch = 0 : i64, scratch_operands = 1 : i64, tpu.core_type = #tpu.core_type<tc>, window_params = [{transform_indices = @transform_0, window_bounds = array<i64: 16, 128>}, {pipeline_mode = #tpu.pipeline_mode<synchronous>, transform_indices = @transform_1, window_bounds = array<i64: 1, 128>}, {pipeline_mode = #tpu.pipeline_mode<synchronous>, transform_indices = @transform_2, window_bounds = array<i64: 1, 128>}, {transform_indices = @transform_3, window_bounds = array<i64: 128, 384>}, {transform_indices = @transform_4, window_bounds = array<i64: 1, 384>}, {transform_indices = @transform_5, window_bounds = array<i64: 16, 384>}]} {
    %c0_i32 = arith.constant 0 : i32
    %0 = arith.cmpi eq, %arg1, %c0_i32 : i32
    %1 = arith.extui %0 : i1 to i32
    %c0_i32_0 = arith.constant 0 : i32
    %2 = arith.cmpi ne, %1, %c0_i32_0 : i32
    scf.if %2 {
      %c0_8 = arith.constant 0 : index
      %c0_9 = arith.constant 0 : index
      %13 = vector.load %arg2[%c0_8, %c0_9] : memref<16x128xf32, #tpu.memory_space<vmem>>, vector<16x128xf32>
      %cst_10 = arith.constant dense<0.000000e+00> : vector<16xf32>
      %14 = vector.multi_reduction <add>, %13, %cst_10 [1] : vector<16x128xf32> to vector<16xf32>
      %15 = vector.shape_cast %14 : vector<16xf32> to vector<16x1xf32>
      %cst_11 = arith.constant 1.280000e+02 : f32
      %16 = vector.broadcast %cst_11 : f32 to vector<16x1xf32>
      %17 = arith.divf %15, %16 : vector<16x1xf32>
      %18 = vector.broadcast %17 : vector<16x1xf32> to vector<16x128xf32>
      %19 = arith.subf %13, %18 : vector<16x128xf32>
      %20 = arith.mulf %19, %19 : vector<16x128xf32>
      %cst_12 = arith.constant dense<0.000000e+00> : vector<16xf32>
      %21 = vector.multi_reduction <add>, %20, %cst_12 [1] : vector<16x128xf32> to vector<16xf32>
      %22 = vector.shape_cast %21 : vector<16xf32> to vector<16x1xf32>
      %cst_13 = arith.constant 1.280000e+02 : f32
      %23 = vector.broadcast %cst_13 : f32 to vector<16x1xf32>
      %24 = arith.divf %22, %23 : vector<16x1xf32>
      %cst_14 = arith.constant 9.99999974E-6 : f32
      %25 = vector.broadcast %cst_14 : f32 to vector<16x1xf32>
      %26 = arith.addf %24, %25 : vector<16x1xf32>
      %27 = math.rsqrt %26 : vector<16x1xf32>
      %28 = vector.broadcast %27 : vector<16x1xf32> to vector<16x128xf32>
      %29 = arith.mulf %19, %28 : vector<16x128xf32>
      %c0_15 = arith.constant 0 : index
      %c0_16 = arith.constant 0 : index
      %30 = vector.load %arg3[%c0_15, %c0_16] : memref<1x128xf32, #tpu.memory_space<vmem>>, vector<1x128xf32>
      %31 = vector.shape_cast %30 : vector<1x128xf32> to vector<128xf32>
      %32 = vector.shape_cast %31 : vector<128xf32> to vector<1x128xf32>
      %33 = vector.broadcast %32 : vector<1x128xf32> to vector<16x128xf32>
      %34 = arith.mulf %29, %33 : vector<16x128xf32>
      %c0_17 = arith.constant 0 : index
      %c0_18 = arith.constant 0 : index
      %35 = vector.load %arg4[%c0_17, %c0_18] : memref<1x128xf32, #tpu.memory_space<vmem>>, vector<1x128xf32>
      %36 = vector.shape_cast %35 : vector<1x128xf32> to vector<128xf32>
      %37 = vector.shape_cast %36 : vector<128xf32> to vector<1x128xf32>
      %38 = vector.broadcast %37 : vector<1x128xf32> to vector<16x128xf32>
      %39 = arith.addf %34, %38 : vector<16x128xf32>
      %40 = arith.truncf %39 : vector<16x128xf32> to vector<16x128xbf16>
      %c0_19 = arith.constant 0 : index
      %c0_20 = arith.constant 0 : index
      %41 = vector.load %arg8[%c0_19, %c0_20] : memref<16x128xbf16, #tpu.memory_space<vmem>>, vector<16x128xbf16>
      tpu.vector_store %arg8[%c0_19, %c0_20], %40 {strides = array<i32>} : memref<16x128xbf16, #tpu.memory_space<vmem>>, vector<16x128xbf16>,
    } else {
    }
    %c0 = arith.constant 0 : index
    %c0_1 = arith.constant 0 : index
    %3 = vector.load %arg8[%c0, %c0_1] : memref<16x128xbf16, #tpu.memory_space<vmem>>, vector<16x128xbf16>
    %c0_2 = arith.constant 0 : index
    %c0_3 = arith.constant 0 : index
    %4 = vector.load %arg5[%c0_2, %c0_3] : memref<128x384xbf16, #tpu.memory_space<vmem>>, vector<128x384xbf16>
    %cst = arith.constant dense<0.000000e+00> : vector<16x384xf32>
    %5 = tpu.matmul %3, %4, %cst {dimension_numbers = #tpu.dot_dimension_numbers<[1], [0], [0], [1], [0, 0, 1, 1], [], []>} : vector<16x128xbf16>, vector<128x384xbf16>, vector<16x384xf32> -> vector<16x384xf32>
    %c0_4 = arith.constant 0 : index
    %c0_5 = arith.constant 0 : index
    %6 = vector.load %arg6[%c0_4, %c0_5] : memref<1x384xf32, #tpu.memory_space<vmem>>, vector<1x384xf32>
    %7 = vector.shape_cast %6 : vector<1x384xf32> to vector<384xf32>
    %8 = vector.shape_cast %7 : vector<384xf32> to vector<1x384xf32>
    %9 = vector.broadcast %8 : vector<1x384xf32> to vector<16x384xf32>
    %10 = arith.addf %5, %9 : vector<16x384xf32>
    %11 = arith.truncf %10 : vector<16x384xf32> to vector<16x384xbf16>
    %c0_6 = arith.constant 0 : index
    %c0_7 = arith.constant 0 : index
    %12 = vector.load %arg7[%c0_6, %c0_7] : memref<16x384xbf16, #tpu.memory_space<vmem>>, vector<16x384xbf16>
    tpu.vector_store %arg7[%c0_6, %c0_7], %11 {strides = array<i32>} : memref<16x384xbf16, #tpu.memory_space<vmem>>, vector<16x384xbf16>,
    return
  }
  func.func @transform_0(%arg0: i32, %arg1: i32) -> (i32, i32) {
    %c0_i32 = arith.constant 0 : i32
    %c0_i32_0 = arith.constant 0 : i32
    return %arg0, %c0_i32 : i32, i32
  }
  func.func @transform_1(%arg0: i32, %arg1: i32) -> (i32, i32) {
    %c0_i32 = arith.constant 0 : i32
    %c0_i32_0 = arith.constant 0 : i32
    %c0_i32_1 = arith.constant 0 : i32
    return %c0_i32, %c0_i32_0 : i32, i32
  }
  func.func @transform_2(%arg0: i32, %arg1: i32) -> (i32, i32) {
    %c0_i32 = arith.constant 0 : i32
    %c0_i32_0 = arith.constant 0 : i32
    %c0_i32_1 = arith.constant 0 : i32
    return %c0_i32, %c0_i32_0 : i32, i32
  }
  func.func @transform_3(%arg0: i32, %arg1: i32) -> (i32, i32) {
    %c0_i32 = arith.constant 0 : i32
    %c0_i32_0 = arith.constant 0 : i32
    return %c0_i32, %arg1 : i32, i32
  }
  func.func @transform_4(%arg0: i32, %arg1: i32) -> (i32, i32) {
    %c0_i32 = arith.constant 0 : i32
    %c0_i32_0 = arith.constant 0 : i32
    return %c0_i32, %arg1 : i32, i32
  }
  func.func @transform_5(%arg0: i32, %arg1: i32) -> (i32, i32) {
    %c0_i32 = arith.constant 0 : i32
    return %arg0, %arg1 : i32, i32
  }
}

</mosaic_0001>

<llo_original>
// kernel: tpu_custom_call.1
$region0: #{tpu_custom_call.1}
  #allocation0 [shape = 'u32[]', space=smem, size = 0x4, offset = 0x4, fixed_abs, tag = 'smem constant byte address 0x4 - core index']
  #allocation1 [shape = 'u32[144,128]{1,0:T(1,128)}', space=vmem, size = 0x12000, scoped, tag = 'internal scratch']
  #allocation2 [shape = 'bf16[16,128]{1,0:T(16,128)(2,1)}', space=vmem, size = 0x1000, scoped, tag = 'scratch operand']
  %s0 = inlined_call_operand.hbm [shape: f32[16,128], index: 0, kind: input, shape index: {}]
  %s1 = inlined_call_operand.vmem [shape: f32[1,128], index: 1, kind: input, shape index: {}]
  %s2 = inlined_call_operand.vmem [shape: f32[1,128], index: 2, kind: input, shape index: {}]
  %s3 = inlined_call_operand.hbm [shape: bf16[128,384], index: 3, kind: input, shape index: {}]
  %s4 = inlined_call_operand.vmem [shape: f32[1,384], index: 4, kind: input, shape index: {}]
  %s5 = inlined_call_operand.hbm [shape: bf16[16,384], index: 5, kind: output, shape index: {}]
  %s6 = sld [smem:[#allocation0]]
  $region42: #{tpu_custom_call.1} parent=0
    _
  %s8 = ssub.s32 1, %s6
  %s9 = scalar_select 0, %s8, %s6
  $region1: #{tpu_custom_call.1} parent=0
    #allocation3 [shape = 'u8[8192]{0}', space=vmem, size = 0x2000, scoped, tag = 'input window, operand 0, single buffered']
    #allocation4 [shape = 's32[1]{0}', space=sflag, size = 0x4, scoped, tag = 'scoped memory for tpu_custom_call.1']
    #allocation5 [shape = 's32[1]{0}', space=sflag, size = 0x4, scoped, tag = 'scoped memory for tpu_custom_call.1']
    #allocation6 [shape = 'u8[98304]{0}', space=vmem, size = 0x18000, scoped, tag = 'input window, operand 3, single buffered']
    #allocation7 [shape = 's32[1]{0}', space=sflag, size = 0x4, scoped, tag = 'scoped memory for tpu_custom_call.1']
    #allocation8 [shape = 'u8[12288]{0}', space=vmem, size = 0x3000, scoped, tag = 'output window, operand 0, single buffered']
    %10 = vsyncpa [#allocation4], 0
    %11 = vsyncpa [#allocation7], 0
    %12 = vsyncpa [#allocation5], 0
    // Predicated region
    $region2: #{tpu_custom_call.1} parent=1 // pred_check
      _
    $region3: #{tpu_custom_call.1} parent=1 // pred_check_branch
      %14 = sbr.rel (0) target = $region5
    $region4: #{tpu_custom_call.1} parent=1 // pred_region
      %s16 = ssub.s32 256, 256
      %17 = vsyncadd [#allocation4], %s16
      %s18 = sshll.u32 [#allocation3], 4
      %s19 = int_to_ptr.vmem [resolvable:$true] %s18
      %24 = dma.hbm_to_vmem [thread:$0]  %s0, 256, %s19, [#allocation4], 128, 128, 8
    $region5: #{tpu_custom_call.1} parent=1 // pred_fallthru
      _
    // Predicated region
    $region6: #{tpu_custom_call.1} parent=1 // pred_check
      _
    $region7: #{tpu_custom_call.1} parent=1 // pred_check_branch
      %26 = sbr.rel (0) target = $region9
    $region8: #{tpu_custom_call.1} parent=1 // pred_region
      _
    $region9: #{tpu_custom_call.1} parent=1 // pred_fallthru
      _
    // Predicated region
    $region10: #{tpu_custom_call.1} parent=1 // pred_check
      _
    $region11: #{tpu_custom_call.1} parent=1 // pred_check_branch
      %28 = sbr.rel (0) target = $region13
    $region12: #{tpu_custom_call.1} parent=1 // pred_region
      _
    $region13: #{tpu_custom_call.1} parent=1 // pred_fallthru
      _
    // Predicated region
    $region14: #{tpu_custom_call.1} parent=1 // pred_check
      _
    $region15: #{tpu_custom_call.1} parent=1 // pred_check_branch
      %30 = sbr.rel (0) target = $region17
    $region16: #{tpu_custom_call.1} parent=1 // pred_region
      %s32 = ssub.s32 3072, 3072
      %33 = vsyncadd [#allocation7], %s32
      %s34 = sshll.u32 [#allocation6], 4
      %s35 = int_to_ptr.vmem [resolvable:$true] %s34
      %40 = dma.hbm_to_vmem [thread:$0]  %s3, 3072, %s35, [#allocation7], 192, 192, 12
    $region17: #{tpu_custom_call.1} parent=1 // pred_fallthru
      _
    // Predicated region
    $region18: #{tpu_custom_call.1} parent=1 // pred_check
      _
    $region19: #{tpu_custom_call.1} parent=1 // pred_check_branch
      %42 = sbr.rel (0) target = $region21
    $region20: #{tpu_custom_call.1} parent=1 // pred_region
      _
    $region21: #{tpu_custom_call.1} parent=1 // pred_fallthru
      _
    // Predicated region
    $region22: #{tpu_custom_call.1} parent=1 // pred_check
      _
    $region23: #{tpu_custom_call.1} parent=1 // pred_check_branch
      %44 = sbr.rel (0) target = $region25
    $region24: #{tpu_custom_call.1} parent=1 // pred_region
      %45 = dma.done [#allocation4], 256
    $region25: #{tpu_custom_call.1} parent=1 // pred_fallthru
      _
    // Predicated region
    $region26: #{tpu_custom_call.1} parent=1 // pred_check
      _
    $region27: #{tpu_custom_call.1} parent=1 // pred_check_branch
      %47 = sbr.rel (0) target = $region29
    $region28: #{tpu_custom_call.1} parent=1 // pred_region
      %48 = dma.done [#allocation7], 3072
    $region29: #{tpu_custom_call.1} parent=1 // pred_fallthru
      _
    %p50 = scmp.eq.s32.totalorder 0, 0
    // Predicated region
    $region30: #{tpu_custom_call.1} parent=1 // pred_check
      %p51 = pneg %p50
    $region31: #{tpu_custom_call.1} parent=1 // pred_check_branch
      %53 = sbr.rel (%p51) target = $region33
    $region32: #{tpu_custom_call.1} parent=1 // pred_region
      %v54 = vld [vmem:[#allocation3] sm:$0xff]
      %v55 = vld [vmem:[#allocation3 + $0x8] sm:$0xff]
      %56 = vadd.xlane.f32.xlu0 %v54
      %v57 = vpop.xlane.xlu0 %56
      %58 = vadd.xlane.f32.xlu0 %v55
      %v59 = vpop.xlane.xlu0 %58
      %v60 = vrcp.pop 128.0
      %v61 = vmul.f32 %v57, %v60
      %v62 = vmul.f32 %v59, %v60
      %v63 = vsub.f32 %v54, %v61
      %v64 = vsub.f32 %v55, %v62
      %v65 = vmul.f32 %v63, %v63
      %v66 = vmul.f32 %v64, %v64
      %67 = vadd.xlane.f32.xlu0 %v65
      %v68 = vpop.xlane.xlu0 %67
      %69 = vadd.xlane.f32.xlu0 %v66
      %v70 = vpop.xlane.xlu0 %69
      %v71 = vmul.f32 %v68, %v60
      %v72 = vmul.f32 %v70, %v60
      %v73 = vadd.f32 %v71, 1e-05
      %v74 = vadd.f32 %v72, 1e-05
      %v75 = vrsqrt.pop %v73
      %v76 = vrsqrt.pop %v74
      %v77 = vmul.f32 %v63, %v75
      %v78 = vmul.f32 %v64, %v76
      %v79 = vld [vmem:[%s1] sm:$0x1]
      %v81 = vlaneseq
      %v82 = vshrl.u32 %v81, 7
      %v83 = vsub.s32 0, %v82
      %v84 = vrot.slane %v79, %v83
      %v86 = vmul.f32 %v77, %v84
      %v87 = vmul.f32 %v78, %v84
      %v88 = vld [vmem:[%s2] sm:$0x1]
      %v90 = vlaneseq
      %v91 = vshrl.u32 %v90, 7
      %v92 = vsub.s32 0, %v91
      %v93 = vrot.slane %v88, %v92
      %v95 = vadd.f32 %v86, %v93
      %v96 = vadd.f32 %v87, %v93
      %v97 = vpack.c.bf16 %v96, %v95
      %98 = vst [vmem:[#allocation2] sm:$0xff] %v97
    $region33: #{tpu_custom_call.1} parent=1 // pred_fallthru
      _
    %v99 = vld [vmem:[#allocation2] sm:$0xff]
    %v100 = vld [vmem:[#allocation6] sm:$0xff]
    %v101 = vld [vmem:[#allocation6 + $0x8] sm:$0xf]
    %v102 = vld [vmem:[#allocation6 + $0xc] sm:$0xff]
    %v103 = vld [vmem:[#allocation6 + $0x14] sm:$0xf]
    %v104 = vld [vmem:[#allocation6 + $0x18] sm:$0xff]
    %v105 = vld [vmem:[#allocation6 + $0x20] sm:$0xf]
    %v106 = vld [vmem:[#allocation6 + $0x24] sm:$0xff]
    %v107 = vld [vmem:[#allocation6 + $0x2c] sm:$0xf]
    %v108 = vld [vmem:[#allocation6 + $0x30] sm:$0xff]
    %v109 = vld [vmem:[#allocation6 + $0x38] sm:$0xf]
    %v110 = vld [vmem:[#allocation6 + $0x3c] sm:$0xff]
    %v111 = vld [vmem:[#allocation6 + $0x44] sm:$0xf]
    %v112 = vld [vmem:[#allocation6 + $0x48] sm:$0xff]
    %v113 = vld [vmem:[#allocation6 + $0x50] sm:$0xf]
    %v114 = vld [vmem:[#allocation6 + $0x54] sm:$0xff]
    %v115 = vld [vmem:[#allocation6 + $0x5c] sm:$0xf]
    %v116 = vld [vmem:[#allocation6 + $0x60] sm:$0xff]
    %v117 = vld [vmem:[#allocation6 + $0x68] sm:$0xf]
    %v118 = vld [vmem:[#allocation6 + $0x6c] sm:$0xff]
    %v119 = vld [vmem:[#allocation6 + $0x74] sm:$0xf]
    %v120 = vld [vmem:[#allocation6 + $0x78] sm:$0xff]
    %v121 = vld [vmem:[#allocation6 + $0x80] sm:$0xf]
    %v122 = vld [vmem:[#allocation6 + $0x84] sm:$0xff]
    %v123 = vld [vmem:[#allocation6 + $0x8c] sm:$0xf]
    %v124 = vld [vmem:[#allocation6 + $0x90] sm:$0xff]
    %v125 = vld [vmem:[#allocation6 + $0x98] sm:$0xf]
    %v126 = vld [vmem:[#allocation6 + $0x9c] sm:$0xff]
    %v127 = vld [vmem:[#allocation6 + $0xa4] sm:$0xf]
    %v128 = vld [vmem:[#allocation6 + $0xa8] sm:$0xff]
    %v129 = vld [vmem:[#allocation6 + $0xb0] sm:$0xf]
    %v130 = vld [vmem:[#allocation6 + $0xb4] sm:$0xff]
    %v131 = vld [vmem:[#allocation6 + $0xbc] sm:$0xf]
    %v132 = vld [vmem:[%s4] sm:$0x7]
    %v134 = vlaneseq
    %v135 = vshrl.u32 %v134, 7
    %v136 = vsub.s32 0, %v135
    %v137 = vrot.slane %v132, %v136
    %v138 = vlaneseq
    %v139 = vshrl.u32 %v138, 7
    %v140 = vsub.s32 1, %v139
    %v141 = vrot.slane %v132, %v140
    %v142 = vlaneseq
    %v143 = vshrl.u32 %v142, 7
    %v144 = vsub.s32 2, %v143
    %v145 = vrot.slane %v132, %v144
    %v181 = vunpack.c.l.b16 %v100
    %v182 = vunpack.c.h.b16 %v100
    %v183 = vunpack.c.l.b16 %v101
    %v184 = vunpack.c.l.b16 %v102
    %v185 = vunpack.c.h.b16 %v102
    %v186 = vunpack.c.l.b16 %v103
    %v187 = vunpack.c.l.b16 %v104
    %v188 = vunpack.c.h.b16 %v104
    %v189 = vunpack.c.l.b16 %v105
    %v190 = vunpack.c.l.b16 %v106
    %v191 = vunpack.c.h.b16 %v106
    %v192 = vunpack.c.l.b16 %v107
    %v193 = vunpack.c.l.b16 %v108
    %v194 = vunpack.c.h.b16 %v108
    %v195 = vunpack.c.l.b16 %v109
    %v196 = vunpack.c.l.b16 %v110
    %v197 = vunpack.c.h.b16 %v110
    %v198 = vunpack.c.l.b16 %v111
    %v199 = vunpack.c.l.b16 %v112
    %v200 = vunpack.c.h.b16 %v112
    %v201 = vunpack.c.l.b16 %v113
    %v202 = vunpack.c.l.b16 %v114
    %v203 = vunpack.c.h.b16 %v114
    %v204 = vunpack.c.l.b16 %v115
    %v205 = vunpack.c.l.b16 %v116
    %v206 = vunpack.c.h.b16 %v116
    %v207 = vunpack.c.l.b16 %v117
    %v208 = vunpack.c.l.b16 %v118
    %v209 = vunpack.c.h.b16 %v118
    %v210 = vunpack.c.l.b16 %v119
    %v211 = vunpack.c.l.b16 %v120
    %v212 = vunpack.c.h.b16 %v120
    %v213 = vunpack.c.l.b16 %v121
    %v214 = vunpack.c.l.b16 %v122
    %v215 = vunpack.c.h.b16 %v122
    %v216 = vunpack.c.l.b16 %v123
    %v217 = vunpack.c.l.b16 %v124
    %v218 = vunpack.c.h.b16 %v124
    %v219 = vunpack.c.l.b16 %v125
    %v220 = vunpack.c.l.b16 %v126
    %v221 = vunpack.c.h.b16 %v126
    %v222 = vunpack.c.l.b16 %v127
    %v223 = vunpack.c.l.b16 %v128
    %v224 = vunpack.c.h.b16 %v128
    %v225 = vunpack.c.l.b16 %v129
    %v226 = vunpack.c.l.b16 %v130
    %v227 = vunpack.c.h.b16 %v130
    %v228 = vunpack.c.l.b16 %v131
    %v229 = vpack.c.b16 %v184, %v181
    %v230 = vpack.c.b16 %v185, %v182
    %v231 = vpack.c.b16 %v186, %v183
    %v232 = vpack.c.b16 %v190, %v187
    %v233 = vpack.c.b16 %v191, %v188
    %v234 = vpack.c.b16 %v192, %v189
    %v235 = vpack.c.b16 %v196, %v193
    %v236 = vpack.c.b16 %v197, %v194
    %v237 = vpack.c.b16 %v198, %v195
    %v238 = vpack.c.b16 %v202, %v199
    %v239 = vpack.c.b16 %v203, %v200
    %v240 = vpack.c.b16 %v204, %v201
    %v241 = vpack.c.b16 %v208, %v205
    %v242 = vpack.c.b16 %v209, %v206
    %v243 = vpack.c.b16 %v210, %v207
    %v244 = vpack.c.b16 %v214, %v211
    %v245 = vpack.c.b16 %v215, %v212
    %v246 = vpack.c.b16 %v216, %v213
    %v247 = vpack.c.b16 %v220, %v217
    %v248 = vpack.c.b16 %v221, %v218
    %v249 = vpack.c.b16 %v222, %v219
    %v250 = vpack.c.b16 %v226, %v223
    %v251 = vpack.c.b16 %v227, %v224
    %v252 = vpack.c.b16 %v228, %v225
    %277 = vmatprep.subr.bf16.mxu0 %v230
    %278 = vmatpush1.bf16.msra.mxu0 %v229
    %279 = vmatprep.subr.bf16.mxu0 %v233
    %280 = vmatpush1.bf16.msra.mxu0 %v232
    %281 = vmatprep.subr.bf16.mxu0 %v236
    %282 = vmatpush1.bf16.msra.mxu0 %v235
    %283 = vmatprep.subr.bf16.mxu0 %v239
    %284 = vmatpush1.bf16.msra.mxu0 %v238
    %285 = vmatprep.subr.bf16.mxu0 %v242
    %286 = vmatpush1.bf16.msra.mxu0 %v241
    %287 = vmatprep.subr.bf16.mxu0 %v245
    %288 = vmatpush1.bf16.msra.mxu0 %v244
    %289 = vmatprep.subr.bf16.mxu0 %v248
    %290 = vmatpush1.bf16.msra.mxu0 %v247
    %291 = vmatprep.subr.bf16.mxu0 %v251
    %292 = vmatpush1.bf16.msra.mxu0 %v250
    %293 = vmatprep.subr.bf16.mxu0 0
    %294 = vmatpush1.bf16.msra.mxu0 0
    %295 = vmatprep.subr.bf16.mxu0 0
    %296 = vmatpush1.bf16.msra.mxu0 0
    %297 = vmatprep.subr.bf16.mxu0 0
    %298 = vmatpush1.bf16.msra.mxu0 0
    %299 = vmatprep.subr.bf16.mxu0 0
    %300 = vmatpush1.bf16.msra.mxu0 0
    %301 = vmatprep.subr.bf16.mxu0 0
    %302 = vmatpush1.bf16.msra.mxu0 0
    %303 = vmatprep.subr.bf16.mxu0 0
    %304 = vmatpush1.bf16.msra.mxu0 0
    %305 = vmatprep.subr.bf16.mxu0 0
    %306 = vmatpush1.bf16.msra.mxu0 0
    %307 = vmatprep.subr.bf16.mxu0 0
    %308 = vmatpush1.bf16.msra.mxu0 0
    %309 = vmatprep.mubr.bf16.mxu0 0
    %310 = vmatmul.mubr.bf16.gmra.mrb[0].mxu0 %v99
    %v311 = vpop.f32.mrb[0].mxu0
    %v312 = vadd.f32 %v137, %v311
    %v313 = vpop.f32.mrb[0].mxu0
    %v314 = vadd.f32 %v141, %v313
    %v315 = vpop.f32.mrb[0].mxu0
    %v316 = vadd.f32 %v137, %v315
    %v317 = vpop.f32.mrb[0].mxu0
    %v318 = vadd.f32 %v141, %v317
    %319 = vdwg.mxu0
    %320 = vmatprep.subr.bf16.mxu0 0
    %321 = vmatpush1.bf16.msra.mxu0 %v231
    %322 = vmatprep.subr.bf16.mxu0 0
    %323 = vmatpush1.bf16.msra.mxu0 %v234
    %324 = vmatprep.subr.bf16.mxu0 0
    %325 = vmatpush1.bf16.msra.mxu0 %v237
    %326 = vmatprep.subr.bf16.mxu0 0
    %327 = vmatpush1.bf16.msra.mxu0 %v240
    %328 = vmatprep.subr.bf16.mxu0 0
    %329 = vmatpush1.bf16.msra.mxu0 %v243
    %330 = vmatprep.subr.bf16.mxu0 0
    %331 = vmatpush1.bf16.msra.mxu0 %v246
    %332 = vmatprep.subr.bf16.mxu0 0
    %333 = vmatpush1.bf16.msra.mxu0 %v249
    %334 = vmatprep.subr.bf16.mxu0 0
    %335 = vmatpush1.bf16.msra.mxu0 %v252
    %336 = vmatprep.subr.bf16.mxu0 0
    %337 = vmatpush1.bf16.msra.mxu0 0
    %338 = vmatprep.subr.bf16.mxu0 0
    %339 = vmatpush1.bf16.msra.mxu0 0
    %340 = vmatprep.subr.bf16.mxu0 0
    %341 = vmatpush1.bf16.msra.mxu0 0
    %342 = vmatprep.subr.bf16.mxu0 0
    %343 = vmatpush1.bf16.msra.mxu0 0
    %344 = vmatprep.subr.bf16.mxu0 0
    %345 = vmatpush1.bf16.msra.mxu0 0
    %346 = vmatprep.subr.bf16.mxu0 0
    %347 = vmatpush1.bf16.msra.mxu0 0
    %348 = vmatprep.subr.bf16.mxu0 0
    %349 = vmatpush1.bf16.msra.mxu0 0
    %350 = vmatprep.subr.bf16.mxu0 0
    %351 = vmatpush1.bf16.msra.mxu0 0
    %352 = vmatprep.mubr.bf16.mxu0 0
    %353 = vmatmul.mubr.bf16.gmra.mrb[0].mxu0 %v99
    %v354 = vpop.f32.mrb[0].mxu0
    %v355 = vadd.f32 %v145, %v354
    %v356 = vpop.f32.mrb[0].mxu0
    %v357 = vpop.f32.mrb[0].mxu0
    %v358 = vadd.f32 %v145, %v357
    %v359 = vpop.f32.mrb[0].mxu0
    %360 = vdwg.mxu0
    %v361 = vpack.c.bf16 %v316, %v312
    %v362 = vpack.c.bf16 %v318, %v314
    %v363 = vpack.c.bf16 %v358, %v355
    %v367 = vunpack.c.l.b16 %v361
    %v368 = vunpack.c.l.b16 %v362
    %v369 = vunpack.c.l.b16 %v363
    %v370 = vunpack.c.h.b16 %v361
    %v371 = vunpack.c.h.b16 %v362
    %v372 = vunpack.c.h.b16 %v363
    %v373 = vpack.c.b16 %v368, %v367
    %v374 = vpack.c.b16 %v369, %v369
    %v375 = vpack.c.b16 %v371, %v370
    %v376 = vpack.c.b16 %v372, %v372
    %381 = vst [vmem:[#allocation8] sm:$0xff] %v373
    %382 = vst [vmem:[#allocation8 + $0x8] sm:$0xf] %v374
    %383 = vst [vmem:[#allocation8 + $0xc] sm:$0xff] %v375
    %384 = vst [vmem:[#allocation8 + $0x14] sm:$0xf] %v376
    // Predicated region
    $region34: #{tpu_custom_call.1} parent=1 // pred_check
      _
    $region35: #{tpu_custom_call.1} parent=1 // pred_check_branch
      %386 = sbr.rel (0) target = $region37
    $region36: #{tpu_custom_call.1} parent=1 // pred_region
      %s388 = ssub.s32 384, 384
      %389 = vsyncadd [#allocation5], %s388
      %s390 = sshll.u32 [#allocation8], 4
      %s391 = int_to_ptr.vmem [resolvable:$true] %s390
      %396 = dma.vmem_to_hbm [thread:$0]  %s391, 384, %s5, [#allocation5], 192, 192, 12
    $region37: #{tpu_custom_call.1} parent=1 // pred_fallthru
      _
    // Predicated region
    $region38: #{tpu_custom_call.1} parent=1 // pred_check
      _
    $region39: #{tpu_custom_call.1} parent=1 // pred_check_branch
      %398 = sbr.rel (0) target = $region41
    $region40: #{tpu_custom_call.1} parent=1 // pred_region
      %399 = dma.done [#allocation5], 384
    $region41: #{tpu_custom_call.1} parent=1 // pred_fallthru
      _
    %400 = vsyncpa [#allocation4], 1
    %401 = vsyncpa [#allocation7], 1
    %402 = vsyncpa [#allocation5], 1

</llo_original>
